<compile_context>
chip_gen: v6e
topology: v6e:2x2x1
jax: 0.10.0
libtpu: 0.0.40
codegen_flags: <defaults>
</compile_context>

<pallas_src>
import functools

import numpy as np
import jax
import jax.numpy as jnp
from jax import lax
from jax.experimental import pallas as pl
from jax.experimental.pallas import tpu as pltpu

_WHOLE_VMEM = pl.BlockSpec(memory_space=pltpu.MemorySpace.VMEM)
_PARALLEL_1D = pltpu.CompilerParams(dimension_semantics=("parallel",))
_HIGHEST = lax.Precision.HIGHEST


def _pick_row_tile(n, max_tile=256):
    """Largest power-of-two row tile (multiple of 128) that divides n.

    Falls back to the whole array (grid=(1,)) when no such tile exists so
    every BlockSpec dim is either a multiple of the native (8, 128) tile or
    equal to the full array dim.
    """
    t = int(max_tile)
    while t >= 128:
        if n % t == 0:
            return t
        t //= 2
    # TODO(synk): pad N to a multiple of 128 for very large, awkward N so the
    # pipelined path is always taken; fine for the sizes used here.
    return n


# ----------------------------------------------------------------------------
# Kernels
# ----------------------------------------------------------------------------
def _cont_bayes_kernel(gamma_ref, x_ref, eps_ref, mu_ref):
    # mu = gamma*x + eps*sqrt(gamma*(1-gamma));  gamma is (TILE, 1)
    g = gamma_ref[...]
    mu_ref[...] = g * x_ref[...] + eps_ref[...] * jnp.sqrt(g * (1.0 - g))


def _disc_bayes_kernel(t_ref, x_ref, eps_ref, theta_ref, *, beta1, K):
    # beta = beta1*t^2 ; y = beta*(K*x - 1) + sqrt(beta*K)*eps ; softmax(y)
    t = t_ref[...]                                           # (TILE, 1)
    beta = jnp.float32(beta1) * t * t
    mean = beta * (jnp.float32(K) * x_ref[...] - 1.0)        # (TILE, K)
    std = jnp.sqrt(beta * jnp.float32(K))                    # (TILE, 1)
    y = mean + std * eps_ref[...]
    y = y - jnp.max(y, axis=-1, keepdims=True)
    e = jnp.exp(y)
    # EUP reciprocal instead of a VALU divide for the softmax denominator.
    theta_ref[...] = e * pl.reciprocal(jnp.sum(e, axis=-1, keepdims=True),
                                       approx=False)


def _cdf_kernel(mu_ref, sigma_ref, f_ref, *, x_bins):
    # 0.5*(1 + erf((xb - mu)/(sigma*sqrt(2)))), clamped: xb>=1 -> 1, xb<=-1 -> 0.
    # Bin boundaries are compile-time scalars; mu/sigma are read once per row
    # tile and 1/(sigma*sqrt(2)) is hoisted out of the Kb loop.
    mu = mu_ref[...]                                          # (TILE, D)
    d = mu.shape[-1]
    inv_sig = pl.reciprocal(sigma_ref[...], approx=False) * jnp.float32(
        1.0 / np.sqrt(2.0))
    for k, xb in enumerate(x_bins):                           # static unroll
        if xb >= 1.0:
            f = jnp.ones_like(mu)
        elif xb <= -1.0:
            f = jnp.zeros_like(mu)
        else:
            f = 0.5 * (1.0 + lax.erf((jnp.float32(xb) - mu) * inv_sig))
        f_ref[:, k * d:(k + 1) * d] = f


def _row_sq(d):
    # sum_j d[:, j]^2 emitted lane-dense as (1, TILE):  ones(1,D) @ (d*d)^T.
    # Runs on the otherwise-idle MXU; avoids a masked (TILE, 1) store and any
    # XLU transpose of the reduction result.
    ones_row = jnp.ones((1, d.shape[-1]), jnp.float32)
    return lax.dot_general(ones_row, d * d, (((1,), (1,)), ((), ())),
                           precision=_HIGHEST,
                           preferred_element_type=jnp.float32)


def _ctime_cont_loss_kernel(t_ref, xp_ref, x_ref, out_ref, *, sigma1):
    # -log(sigma1) * sigma1**(-2t) * ||x_pred - x||^2_row
    log_s1 = jnp.float32(np.log(sigma1))
    sq = _row_sq(xp_ref[...] - x_ref[...])                    # (1, TILE)
    out_ref[...] = (-log_s1) * jnp.exp(-2.0 * log_s1 * t_ref[...]) * sq


def _dtime_cont_loss_kernel(i_ref, xp_ref, x_ref, out_ref, *, sigma1, n_steps):
    # N*(1 - sigma1**(2/N)) / (2*sigma1**(2i/N)) * ||x_pred - x||^2_row
    log_s1 = jnp.float32(np.log(sigma1))
    n = jnp.float32(n_steps)
    sq = _row_sq(xp_ref[...] - x_ref[...])
    w0 = 0.5 * n * (1.0 - jnp.exp((2.0 / n) * log_s1))
    out_ref[...] = w0 * jnp.exp((-2.0 / n) * log_s1 * i_ref[...]) * sq


def _fused_cont_loss_kernel(t_ref, i_ref, xp_ref, x_ref, ct_ref, dt_ref, *,
                            sigma1, n_steps):
    # ctime + dtime continuous losses share (x_pred - x): read the big
    # operands and do the reduction exactly once.
    log_s1 = jnp.float32(np.log(sigma1))
    n = jnp.float32(n_steps)
    sq = _row_sq(xp_ref[...] - x_ref[...])
    ct_ref[...] = (-log_s1) * jnp.exp(-2.0 * log_s1 * t_ref[...]) * sq
    w0 = 0.5 * n * (1.0 - jnp.exp((2.0 / n) * log_s1))
    dt_ref[...] = w0 * jnp.exp((-2.0 / n) * log_s1 * i_ref[...]) * sq


def _ctime_disc_loss_kernel(t_ref, ex_ref, eh_ref, out_ref, *, beta1, K):
    # K * beta1 * t * sum((e_x - e_hat)^2, -1)
    sq = _row_sq(ex_ref[...] - eh_ref[...])
    out_ref[...] = (jnp.float32(K) * jnp.float32(beta1)) * t_ref[...] * sq


def _zero_com_kernel(oh_ref, x_ref, out_ref):
    # scatter_mean via matmuls:  x - onehot @ ((onehot^T @ x) * (1/counts)).
    oh = oh_ref[...]                                          # (N, S)
    x = x_ref[...]                                            # (N, Dp_pad)
    dn = (((0,), (0,)), ((), ()))                             # contract rows
    sums = lax.dot_general(oh, x, dn, precision=_HIGHEST,
                           preferred_element_type=jnp.float32)  # (S, Dp_pad)
    counts = jnp.sum(oh, axis=0, keepdims=True)               # (1, S) on XLU
    # NOTE: reference divides by raw counts; max(., 1) only differs if a
    # segment id in [0, num_segments) is empty.
    inv_c = pl.reciprocal(jnp.maximum(counts, 1.0), approx=False)   # (1, S)
    gathered = jnp.dot(oh * inv_c, sums, precision=_HIGHEST,
                       preferred_element_type=jnp.float32)    # (N, Dp_pad)
    out_ref[...] = x - gathered


# ----------------------------------------------------------------------------
# Module wrapper (glue in plain JAX, hot path in Pallas)
# ----------------------------------------------------------------------------
class BFNBasePallas:
    def __init__(self, sigma1=0.02, beta1=1.5, max_row_tile=256):
        self.sigma1 = float(sigma1)
        self.beta1 = float(beta1)
        self.max_row_tile = int(max_row_tile)

    # pure-python helper, identical to the torch version
    def get_k_params(self, bins):
        list_c, list_l, list_r = [], [], []
        for k in range(1, int(bins + 1)):
            k_c = (2 * k - 1) / bins - 1
            list_c.append(k_c)
            list_l.append(k_c - 1 / bins)
            list_r.append(k_c + 1 / bins)
        return list_c, list_l, list_r

    # ------------------------------------------------------------ updates
    def continuous_var_bayesian_update(self, t, x, eps):
        # t: (N,1), x/eps: (N,D)   (eps plays the role of torch.randn_like(x))
        N, D = x.shape
        t = t.reshape(N, 1).astype(jnp.float32)
        x = x.astype(jnp.float32)
        eps = eps.astype(jnp.float32)
        # gamma is O(N): compute it once here and feed it to the tiled kernel,
        # so the kernel's only (lane-dense) output is the (N, D) mu.
        gamma = 1.0 - jnp.exp(2.0 * jnp.float32(np.log(self.sigma1)) * t)
        tile = _pick_row_tile(N, self.max_row_tile)
        mu = pl.pallas_call(
            _cont_bayes_kernel,
            out_shape=jax.ShapeDtypeStruct((N, D), jnp.float32),
            grid=(N // tile,),
            in_specs=[pl.BlockSpec((tile, 1), lambda i: (i, 0)),
                      pl.BlockSpec((tile, D), lambda i: (i, 0)),
                      pl.BlockSpec((tile, D), lambda i: (i, 0))],
            out_specs=pl.BlockSpec((tile, D), lambda i: (i, 0)),
            compiler_params=_PARALLEL_1D,
        )(gamma, x, eps)
        return mu, gamma

    def discrete_var_bayesian_update(self, t, one_hot_x, eps, K):
        N, Kd = one_hot_x.shape
        t = t.reshape(N, 1).astype(jnp.float32)
        tile = _pick_row_tile(N, self.max_row_tile)
        kern = functools.partial(_disc_bayes_kernel, beta1=self.beta1, K=K)
        theta = pl.pallas_call(
            kern,
            out_shape=jax.ShapeDtypeStruct((N, Kd), jnp.float32),
            grid=(N // tile,),
            in_specs=[pl.BlockSpec((tile, 1), lambda i: (i, 0)),
                      pl.BlockSpec((tile, Kd), lambda i: (i, 0)),
                      pl.BlockSpec((tile, Kd), lambda i: (i, 0))],
            out_specs=pl.BlockSpec((tile, Kd), lambda i: (i, 0)),
            compiler_params=_PARALLEL_1D,
        )(t, one_hot_x.astype(jnp.float32), eps.astype(jnp.float32))
        return theta

    # ------------------------------------------------------------ CDF
    def discretised_cdf(self, mu, sigma, x_bins):
        # mu/sigma: (N, D); x_bins: (Kb,) static bin boundaries -> (N, Kb, D).
        N, D = mu.shape
        # TODO(synk): if x_bins must stay a traced device array under jit,
        # stream it through an SMEM BlockSpec instead of baking constants.
        x_bins_host = tuple(float(v) for v in np.asarray(x_bins, np.float32))
        Kb = len(x_bins_host)
        tile = _pick_row_tile(N, self.max_row_tile)
        kern = functools.partial(_cdf_kernel, x_bins=x_bins_host)
        f = pl.pallas_call(
            kern,
            out_shape=jax.ShapeDtypeStruct((N, Kb * D), jnp.float32),
            grid=(N // tile,),
            in_specs=[pl.BlockSpec((tile, D), lambda i: (i, 0)),
                      pl.BlockSpec((tile, D), lambda i: (i, 0))],
            out_specs=pl.BlockSpec((tile, Kb * D), lambda i: (i, 0)),
            compiler_params=_PARALLEL_1D,
        )(mu.astype(jnp.float32), sigma.astype(jnp.float32))
        return f.reshape(N, Kb, D)

    # ------------------------------------------------------------ losses
    def _row_loss(self, kern, w, xp, x):
        N = x.shape[0]
        xp2 = xp.reshape(N, -1).astype(jnp.float32)
        x2 = x.reshape(N, -1).astype(jnp.float32)
        D = xp2.shape[1]
        w_row = w.reshape(1, N).astype(jnp.float32)       # lane-dense weights
        tile = _pick_row_tile(N, self.max_row_tile)
        out = pl.pallas_call(
            kern,
            out_shape=jax.ShapeDtypeStruct((1, N), jnp.float32),
            grid=(N // tile,),
            in_specs=[pl.BlockSpec((1, tile), lambda i: (0, i)),
                      pl.BlockSpec((tile, D), lambda i: (i, 0)),
                      pl.BlockSpec((tile, D), lambda i: (i, 0))],
            out_specs=pl.BlockSpec((1, tile), lambda i: (0, i)),
            compiler_params=_PARALLEL_1D,
        )(w_row, xp2, x2)
        return out.reshape(N)

    def ctime4continuous_loss(self, t, x_pred, x):
        kern = functools.partial(_ctime_cont_loss_kernel, sigma1=self.sigma1)
        return self._row_loss(kern, t, x_pred, x)

    def dtime4continuous_loss(self, i, n_steps, x_pred, x):
        kern = functools.partial(_dtime_cont_loss_kernel,
                                 sigma1=self.sigma1, n_steps=float(n_steps))
        return self._row_loss(kern, i, x_pred, x)

    def fused_continuous_losses(self, t, i, n_steps, x_pred, x):
        # ctime + dtime in one pass over (x_pred, x).
        N = x.shape[0]
        xp2 = x_pred.reshape(N, -1).astype(jnp.float32)
        x2 = x.reshape(N, -1).astype(jnp.float32)
        D = xp2.shape[1]
        t_row = t.reshape(1, N).astype(jnp.float32)
        i_row = i.reshape(1, N).astype(jnp.float32)
        tile = _pick_row_tile(N, self.max_row_tile)
        kern = functools.partial(_fused_cont_loss_kernel,
                                 sigma1=self.sigma1, n_steps=float(n_steps))
        ct, dt = pl.pallas_call(
            kern,
            out_shape=(jax.ShapeDtypeStruct((1, N), jnp.float32),
                       jax.ShapeDtypeStruct((1, N), jnp.float32)),
            grid=(N // tile,),
            in_specs=[pl.BlockSpec((1, tile), lambda g: (0, g)),
                      pl.BlockSpec((1, tile), lambda g: (0, g)),
                      pl.BlockSpec((tile, D), lambda g: (g, 0)),
                      pl.BlockSpec((tile, D), lambda g: (g, 0))],
            out_specs=(pl.BlockSpec((1, tile), lambda g: (0, g)),
                       pl.BlockSpec((1, tile), lambda g: (0, g))),
            compiler_params=_PARALLEL_1D,
        )(t_row, i_row, xp2, x2)
        return ct.reshape(N), dt.reshape(N)

    def ctime4discrete_loss(self, t, one_hot_x, p_0, K):
        kern = functools.partial(_ctime_disc_loss_kernel, beta1=self.beta1, K=K)
        return self._row_loss(kern, t, one_hot_x, p_0)

    def ctime4discreteised_loss(self, t, x_pred, x):
        # identical formula to ctime4continuous_loss
        return self.ctime4continuous_loss(t, x_pred, x)

    # ------------------------------------------------------------ utilities
    def zero_center_of_mass(self, x_pos, segment_ids, num_segments=None):
        N, Dp = x_pos.shape
        if num_segments is None:
            # TODO(synk): host sync; pass num_segments statically under jit.
            num_segments = int(jax.device_get(jnp.max(segment_ids))) + 1
        onehot = jax.nn.one_hot(segment_ids, num_segments, dtype=jnp.float32)
        # pad the tiny position dim to 128 lanes so MXU outputs are lane-dense
        dp_pad = ((Dp + 127) // 128) * 128
        x32 = x_pos.astype(jnp.float32)
        x_pad = x32 if dp_pad == Dp else jnp.pad(x32, ((0, 0), (0, dp_pad - Dp)))
        out = pl.pallas_call(
            _zero_com_kernel,
            out_shape=jax.ShapeDtypeStruct((N, dp_pad), jnp.float32),
            in_specs=[_WHOLE_VMEM, _WHOLE_VMEM],
            out_specs=_WHOLE_VMEM,
        )(onehot, x_pad)
        return out[:, :Dp]


# ----------------------------------------------------------------------------
# Demo / self-check
# ----------------------------------------------------------------------------
if __name__ == "__main__":
    model = BFNBasePallas(sigma1=0.02, beta1=1.5, max_row_tile=256)

    N, D, K, Dpos = 512, 32, 16, 3      # N=512 exercises the 2-step tiled grid
    n_bins, n_steps, S = 8, 10, 4

    key = jax.random.PRNGKey(0)
    ks = jax.random.split(key, 10)

    t = jax.random.uniform(ks[0], (N, 1), jnp.float32, minval=1e-3, maxval=1.0)
    x = jax.random.normal(ks[1], (N, D), jnp.float32)
    eps_x = jax.random.normal(ks[2], (N, D), jnp.float32)
    x_pred = x + 0.1 * jax.random.normal(ks[3], (N, D), jnp.float32)

    labels = jax.random.randint(ks[4], (N,), 0, K)
    one_hot_x = jax.nn.one_hot(labels, K, dtype=jnp.float32)
    eps_k = jax.random.normal(ks[5], (N, K), jnp.float32)

    mu_cdf = 0.5 * jax.random.normal(ks[6], (N, D), jnp.float32)
    sigma_cdf = jax.random.uniform(ks[7], (N, D), jnp.float32,
                                   minval=0.2, maxval=1.0)

    x_pos = jax.random.normal(ks[8], (N, Dpos), jnp.float32)
    segment_ids = (jnp.arange(N) // (N // S)).astype(jnp.int32)

    i_steps = jax.random.randint(ks[9], (N, 1), 1, n_steps + 1).astype(jnp.float32)

    # ---- run kernels --------------------------------------------------------
    mu, gamma = model.continuous_var_bayesian_update(t, x, eps_x)
    theta = model.discrete_var_bayesian_update(t, one_hot_x, eps_k, K)

    _, _, k_r = model.get_k_params(n_bins)
    x_bins = jnp.asarray(k_r, dtype=jnp.float32)
    cdf = model.discretised_cdf(mu_cdf, sigma_cdf, x_bins)

    l_cont = model.ctime4continuous_loss(t, x_pred, x)
    l_dtime = model.dtime4continuous_loss(i_steps, n_steps, x_pred, x)
    l_cont_f, l_dtime_f = model.fused_continuous_losses(t, i_steps, n_steps,
                                                        x_pred, x)
    l_disc = model.ctime4discrete_loss(t, one_hot_x, theta, K)
    l_dised = model.ctime4discreteised_loss(t, x_pred, x)
    centered = model.zero_center_of_mass(x_pos, segment_ids, num_segments=S)

    jax.block_until_ready((mu, gamma, theta, cdf, l_cont, l_dtime,
                           l_cont_f, l_dtime_f, l_disc, l_dised, centered))

    # ---- correctness checks vs pure-JAX references ---------------------------
    sigma1, beta1 = model.sigma1, model.beta1

    gamma_ref = 1.0 - jnp.power(sigma1, 2.0 * t)
    mu_ref = gamma_ref * x + eps_x * jnp.sqrt(gamma_ref * (1.0 - gamma_ref))
    np.testing.assert_allclose(np.asarray(mu), np.asarray(mu_ref),
                               rtol=2e-3, atol=2e-3)

    beta = beta1 * t * t
    y_ref = beta * (K * one_hot_x - 1.0) + jnp.sqrt(beta * K) * eps_k
    theta_ref = jax.nn.softmax(y_ref, axis=-1)
    np.testing.assert_allclose(np.asarray(theta), np.asarray(theta_ref),
                               rtol=2e-3, atol=2e-3)

    d = x_pred - x
    sq = jnp.sum(d * d, axis=1)
    ref_lcont = -jnp.log(sigma1) * sq * jnp.power(sigma1, -2.0 * t.reshape(-1))
    np.testing.assert_allclose(np.asarray(l_cont), np.asarray(ref_lcont),
                               rtol=2e-3, atol=2e-3)
    np.testing.assert_allclose(np.asarray(l_cont_f), np.asarray(ref_lcont),
                               rtol=2e-3, atol=2e-3)
    np.testing.assert_allclose(np.asarray(l_dised), np.asarray(ref_lcont),
                               rtol=2e-3, atol=2e-3)

    w_ref = (n_steps * (1.0 - np.power(sigma1, 2.0 / n_steps))
             / (2.0 * jnp.power(sigma1, 2.0 * i_steps.reshape(-1) / n_steps)))
    ref_ldtime = w_ref * sq
    np.testing.assert_allclose(np.asarray(l_dtime), np.asarray(ref_ldtime),
                               rtol=2e-3, atol=2e-3)
    np.testing.assert_allclose(np.asarray(l_dtime_f), np.asarray(ref_ldtime),
                               rtol=2e-3, atol=2e-3)

    dd = one_hot_x - theta
    ref_ldisc = K * beta1 * t.reshape(-1) * jnp.sum(dd * dd, axis=-1)
    np.testing.assert_allclose(np.asarray(l_disc), np.asarray(ref_ldisc),
                               rtol=2e-3, atol=2e-3)

    xb = x_bins.reshape(1, n_bins, 1)
    ref_cdf = 0.5 * (1.0 + jax.scipy.special.erf(
        (xb - mu_cdf[:, None, :]) / (sigma_cdf[:, None, :] * np.sqrt(2.0))))
    ref_cdf = jnp.where(xb >= 1.0, 1.0, ref_cdf)
    ref_cdf = jnp.where(xb <= -1.0, 0.0, ref_cdf)
    np.testing.assert_allclose(np.asarray(cdf), np.asarray(ref_cdf),
                               rtol=2e-3, atol=2e-3)

    seg_sum = jax.ops.segment_sum(x_pos, segment_ids, num_segments=S)
    seg_cnt = jax.ops.segment_sum(jnp.ones((N,), jnp.float32), segment_ids,
                                  num_segments=S)
    ref_centered = x_pos - (seg_sum / seg_cnt[:, None])[segment_ids]
    np.testing.assert_allclose(np.asarray(centered), np.asarray(ref_centered),
                               rtol=2e-3, atol=2e-3)

    print("KERNEL_OK")
</pallas_src>

<mosaic_0001>
module attributes {stable_mosaic.version = 11 : i64} {
  func.func @_cont_bayes_kernel(%arg0: i32, %arg1: memref<256x1xf32, #tpu.memory_space<vmem>>, %arg2: memref<256x32xf32, #tpu.memory_space<vmem>>, %arg3: memref<256x32xf32, #tpu.memory_space<vmem>>, %arg4: memref<256x32xf32, #tpu.memory_space<vmem>>) attributes {dimension_semantics = [#tpu.dimension_semantics<parallel>], iteration_bounds = array<i64: 2>, scalar_prefetch = 0 : i64, scratch_operands = 0 : i64, tpu.core_type = #tpu.core_type<tc>, window_params = [{transform_indices = @transform_0, window_bounds = array<i64: 256, 1>}, {transform_indices = @transform_1, window_bounds = array<i64: 256, 32>}, {transform_indices = @transform_2, window_bounds = array<i64: 256, 32>}, {transform_indices = @transform_3, window_bounds = array<i64: 256, 32>}]} {
    %c0 = arith.constant 0 : index
    %c0_0 = arith.constant 0 : index
    %0 = vector.load %arg1[%c0, %c0_0] : memref<256x1xf32, #tpu.memory_space<vmem>>, vector<256x1xf32>
    %c0_1 = arith.constant 0 : index
    %c0_2 = arith.constant 0 : index
    %1 = vector.load %arg2[%c0_1, %c0_2] : memref<256x32xf32, #tpu.memory_space<vmem>>, vector<256x32xf32>
    %2 = vector.broadcast %0 : vector<256x1xf32> to vector<256x32xf32>
    %3 = arith.mulf %2, %1 : vector<256x32xf32>
    %c0_3 = arith.constant 0 : index
    %c0_4 = arith.constant 0 : index
    %4 = vector.load %arg3[%c0_3, %c0_4] : memref<256x32xf32, #tpu.memory_space<vmem>>, vector<256x32xf32>
    %cst = arith.constant 1.000000e+00 : f32
    %5 = vector.broadcast %cst : f32 to vector<256x1xf32>
    %6 = arith.subf %5, %0 : vector<256x1xf32>
    %7 = arith.mulf %0, %6 : vector<256x1xf32>
    %8 = math.sqrt %7 : vector<256x1xf32>
    %9 = vector.broadcast %8 : vector<256x1xf32> to vector<256x32xf32>
    %10 = arith.mulf %4, %9 : vector<256x32xf32>
    %11 = arith.addf %3, %10 : vector<256x32xf32>
    %c0_5 = arith.constant 0 : index
    %c0_6 = arith.constant 0 : index
    %12 = vector.load %arg4[%c0_5, %c0_6] : memref<256x32xf32, #tpu.memory_space<vmem>>, vector<256x32xf32>
    tpu.vector_store %arg4[%c0_5, %c0_6], %11 {strides = array<i32>} : memref<256x32xf32, #tpu.memory_space<vmem>>, vector<256x32xf32>,
    return
  }
  func.func @transform_0(%arg0: i32) -> (i32, i32) {
    %c0_i32 = arith.constant 0 : i32
    %c0_i32_0 = arith.constant 0 : i32
    return %arg0, %c0_i32 : i32, i32
  }
  func.func @transform_1(%arg0: i32) -> (i32, i32) {
    %c0_i32 = arith.constant 0 : i32
    %c0_i32_0 = arith.constant 0 : i32
    return %arg0, %c0_i32 : i32, i32
  }
  func.func @transform_2(%arg0: i32) -> (i32, i32) {
    %c0_i32 = arith.constant 0 : i32
    %c0_i32_0 = arith.constant 0 : i32
    return %arg0, %c0_i32 : i32, i32
  }
  func.func @transform_3(%arg0: i32) -> (i32, i32) {
    %c0_i32 = arith.constant 0 : i32
    %c0_i32_0 = arith.constant 0 : i32
    return %arg0, %c0_i32 : i32, i32
  }
}

</mosaic_0001>

<llo_original>
// kernel: tpu_custom_call.1
$region0: #{tpu_custom_call.1}
  #allocation0 [shape = 'u32[]', space=smem, size = 0x4, offset = 0x4, fixed_abs, tag = 'smem constant byte address 0x4 - core index']
  #allocation1 [shape = 'u32[144,128]{1,0:T(1,128)}', space=vmem, size = 0x12000, scoped, tag = 'internal scratch']
  %s0 = inlined_call_operand.vmem [shape: f32[512,1], index: 0, kind: input, shape index: {}]
  %s1 = inlined_call_operand.vmem [shape: f32[512,32], index: 1, kind: input, shape index: {}]
  %s2 = inlined_call_operand.vmem [shape: f32[512,32], index: 2, kind: input, shape index: {}]
  %s3 = inlined_call_operand.vmem [shape: f32[512,32], index: 3, kind: output, shape index: {}]
  %s4 = sld [smem:[#allocation0]]
  $region45: #{tpu_custom_call.1} parent=0
    _
  %s6 = ssub.s32 1, %s4
  %s7 = scalar_select 0, %s6, %s4
  loop: start=0, step=1, limit=4
  $region2: #{tpu_custom_call.1} parent=0 // loop_pre_header
    _
  $region3: #{tpu_custom_call.1} parent=0 // loop_header
    %s9 = sphi 0, %s13
    %p10 = scmp.ge.s32.totalorder %s9, 4
    %s19 = sphi 0, %s21
    %s22 = sphi 0, %s19
    %s23 = sphi 0, %s22
    %s39 = sphi 0, %s23
    %s45 = sphi 0, %s47
    %s48 = sphi 0, %s45
    %s49 = sphi 0, %s48
    %s65 = sphi 0, %s49
    %s71 = sphi 0, %s73
    %s74 = sphi 0, %s71
    %s75 = sphi 0, %s74
    %s91 = sphi 0, %s75
    %s97 = sphi 0, %s99
    %s100 = sphi 0, %s97
    %s101 = sphi 0, %s100
    %s117 = sphi 0, %s101
  $region4: #{tpu_custom_call.1} parent=0 // loop_header_branch
    %12 = sbr.rel (%p10) target = $region8
  $region5: #{tpu_custom_call.1} parent=0 // loop_body
    %s14 = ssub.s32 %s9, 1
    %s15 = ssub.s32 %s9, 2
    %s16 = sadd.s32 %s9, 1
    %s17 = ssub.s32 %s9, %s16
    %p18 = scmp.eq.s32.totalorder %s17, 0
    %s20 = sadd.s32 %s19, 1
    %s21 = scalar_select %p18, %s19, %s20
    %p24 = pneg %p18
    %p25 = scmp.eq.s32.totalorder %s9, 1
    %p26 = por %p24, %p25
    %p27 = scmp.ne.s32.totalorder %s19, %s22
    %p28 = scmp.eq.s32.totalorder %s9, 0
    %p29 = por %p27, %p28
    %p30 = scmp.ne.s32.totalorder %s19, %s22
    %p31 = scmp.eq.s32.totalorder %s14, 1
    %p32 = por %p30, %p31
    %p33 = scmp.ne.s32.totalorder %s22, %s23
    %p34 = scmp.eq.s32.totalorder %s14, 0
    %p35 = por %p33, %p34
    %p36 = scmp.ne.s32.totalorder %s22, %s23
    %p37 = scmp.eq.s32.totalorder %s15, 1
    %p38 = por %p36, %p37
    %p40 = scmp.ne.s32.totalorder %s23, %s39
    %p41 = scmp.eq.s32.totalorder %s15, 0
    %p42 = por %p40, %p41
    %s43 = ssub.s32 %s9, %s16
    %p44 = scmp.eq.s32.totalorder %s43, 0
    %s46 = sadd.s32 %s45, 1
    %s47 = scalar_select %p44, %s45, %s46
    %p50 = pneg %p44
    %p51 = scmp.eq.s32.totalorder %s9, 1
    %p52 = por %p50, %p51
    %p53 = scmp.ne.s32.totalorder %s45, %s48
    %p54 = scmp.eq.s32.totalorder %s9, 0
    %p55 = por %p53, %p54
    %p56 = scmp.ne.s32.totalorder %s45, %s48
    %p57 = scmp.eq.s32.totalorder %s14, 1
    %p58 = por %p56, %p57
    %p59 = scmp.ne.s32.totalorder %s48, %s49
    %p60 = scmp.eq.s32.totalorder %s14, 0
    %p61 = por %p59, %p60
    %p62 = scmp.ne.s32.totalorder %s48, %s49
    %p63 = scmp.eq.s32.totalorder %s15, 1
    %p64 = por %p62, %p63
    %p66 = scmp.ne.s32.totalorder %s49, %s65
    %p67 = scmp.eq.s32.totalorder %s15, 0
    %p68 = por %p66, %p67
    %s69 = ssub.s32 %s9, %s16
    %p70 = scmp.eq.s32.totalorder %s69, 0
    %s72 = sadd.s32 %s71, 1
    %s73 = scalar_select %p70, %s71, %s72
    %p76 = pneg %p70
    %p77 = scmp.eq.s32.totalorder %s9, 1
    %p78 = por %p76, %p77
    %p79 = scmp.ne.s32.totalorder %s71, %s74
    %p80 = scmp.eq.s32.totalorder %s9, 0
    %p81 = por %p79, %p80
    %p82 = scmp.ne.s32.totalorder %s71, %s74
    %p83 = scmp.eq.s32.totalorder %s14, 1
    %p84 = por %p82, %p83
    %p85 = scmp.ne.s32.totalorder %s74, %s75
    %p86 = scmp.eq.s32.totalorder %s14, 0
    %p87 = por %p85, %p86
    %p88 = scmp.ne.s32.totalorder %s74, %s75
    %p89 = scmp.eq.s32.totalorder %s15, 1
    %p90 = por %p88, %p89
    %p92 = scmp.ne.s32.totalorder %s75, %s91
    %p93 = scmp.eq.s32.totalorder %s15, 0
    %p94 = por %p92, %p93
    %s95 = ssub.s32 %s9, %s16
    %p96 = scmp.eq.s32.totalorder %s95, 0
    %s98 = sadd.s32 %s97, 1
    %s99 = scalar_select %p96, %s97, %s98
    %p102 = pneg %p96
    %p103 = scmp.eq.s32.totalorder %s9, 1
    %p104 = por %p102, %p103
    %p105 = scmp.ne.s32.totalorder %s97, %s100
    %p106 = scmp.eq.s32.totalorder %s9, 0
    %p107 = por %p105, %p106
    %p108 = scmp.ne.s32.totalorder %s97, %s100
    %p109 = scmp.eq.s32.totalorder %s14, 1
    %p110 = por %p108, %p109
    %p111 = scmp.ne.s32.totalorder %s100, %s101
    %p112 = scmp.eq.s32.totalorder %s14, 0
    %p113 = por %p111, %p112
    %p114 = scmp.ne.s32.totalorder %s100, %s101
    %p115 = scmp.eq.s32.totalorder %s15, 1
    %p116 = por %p114, %p115
    %p118 = scmp.ne.s32.totalorder %s101, %s117
    %p119 = scmp.eq.s32.totalorder %s15, 0
    %p120 = por %p118, %p119
    %p121 = scmp.le.s32.totalorder 1, %s9
    %p122 = scmp.lt.s32.totalorder %s9, 3
    %p123 = pnand %p121, %p122
    %p124 = pneg %p123
    // Predicated region
    $region9: #{tpu_custom_call.1} parent=5 // pred_check
      _
    $region10: #{tpu_custom_call.1} parent=5 // pred_check_branch
      %126 = sbr.rel (%p123) target = $region12
    $region11: #{tpu_custom_call.1} parent=5 // pred_region
      %s127 = ssub.s32 %s9, 1
    $region12: #{tpu_custom_call.1} parent=5 // pred_fallthru
      _
    %p128 = scmp.lt.s32.totalorder %s9, 2
    // Predicated region
    $region13: #{tpu_custom_call.1} parent=5 // pred_check
      %p129 = pneg %p128
    $region14: #{tpu_custom_call.1} parent=5 // pred_check_branch
      %131 = sbr.rel (%p129) target = $region16
    $region15: #{tpu_custom_call.1} parent=5 // pred_region
      // Predicated region
      $region17: #{tpu_custom_call.1} parent=15 // pred_check
        %p132 = pneg %p29
      $region18: #{tpu_custom_call.1} parent=15 // pred_check_branch
        %134 = sbr.rel (%p132) target = $region20
      $region19: #{tpu_custom_call.1} parent=15 // pred_region
        %s135 = smul.u32 32, %s9
        %p136 = scmp.lt.s32.totalorder %s135, 63
        %s137 = scalar_select %p136, %s135, 63
        %s138 = smul.addr %s137, 8
        %s139 = scalar_lea.vmem %s0, %s138
        %s140 = smul.u32 32, %s9
      $region20: #{tpu_custom_call.1} parent=15 // pred_fallthru
        _
      // Predicated region
      $region21: #{tpu_custom_call.1} parent=15 // pred_check
        %p141 = pneg %p55
      $region22: #{tpu_custom_call.1} parent=15 // pred_check_branch
        %143 = sbr.rel (%p141) target = $region24
      $region23: #{tpu_custom_call.1} parent=15 // pred_region
        %s144 = smul.u32 32, %s9
        %p145 = scmp.lt.s32.totalorder %s144, 63
        %s146 = scalar_select %p145, %s144, 63
        %s147 = smul.addr %s146, 8
        %s148 = scalar_lea.vmem %s1, %s147
        %s149 = smul.u32 32, %s9
      $region24: #{tpu_custom_call.1} parent=15 // pred_fallthru
        _
      // Predicated region
      $region25: #{tpu_custom_call.1} parent=15 // pred_check
        %p150 = pneg %p81
      $region26: #{tpu_custom_call.1} parent=15 // pred_check_branch
        %152 = sbr.rel (%p150) target = $region28
      $region27: #{tpu_custom_call.1} parent=15 // pred_region
        %s153 = smul.u32 32, %s9
        %p154 = scmp.lt.s32.totalorder %s153, 63
        %s155 = scalar_select %p154, %s153, 63
        %s156 = smul.addr %s155, 8
        %s157 = scalar_lea.vmem %s2, %s156
        %s158 = smul.u32 32, %s9
      $region28: #{tpu_custom_call.1} parent=15 // pred_fallthru
        _
    $region16: #{tpu_custom_call.1} parent=5 // pred_fallthru
      _
    %p159 = scmp.le.s32.totalorder 1, %s9
    %p160 = scmp.lt.s32.totalorder %s9, 3
    %p161 = pnand %p159, %p160
    %p162 = pneg %p161
    // Predicated region
    $region29: #{tpu_custom_call.1} parent=5 // pred_check
      _
    $region30: #{tpu_custom_call.1} parent=5 // pred_check_branch
      %164 = sbr.rel (%p161) target = $region32
    $region31: #{tpu_custom_call.1} parent=5 // pred_region
      %s165 = ssub.s32 %s9, 1
      %s166 = smul.u32 32, %s14
      %p167 = scmp.lt.s32.totalorder %s166, 63
      %s168 = scalar_select %p167, %s166, 63
      %s169 = smul.addr %s168, 8
      %s170 = scalar_lea.vmem %s0, %s169
      %p171 = pneg %p35
      %p172 = pneg %p32
      %s173 = smul.u32 32, %s14
      %p174 = scmp.lt.s32.totalorder %s173, 63
      %s175 = scalar_select %p174, %s173, 63
      %s176 = smul.addr %s175, 8
      %s177 = scalar_lea.vmem %s1, %s176
      %p178 = pneg %p61
      %p179 = pneg %p58
      %s180 = smul.u32 32, %s14
      %p181 = scmp.lt.s32.totalorder %s180, 63
      %s182 = scalar_select %p181, %s180, 63
      %s183 = smul.addr %s182, 8
      %s184 = scalar_lea.vmem %s2, %s183
      %p185 = pneg %p87
      %p186 = pneg %p84
      %p187 = pneg %p113
      %p188 = pneg %p110
      %s189 = smul.u32 32, %s14
      %p190 = scmp.lt.s32.totalorder %s189, 63
      %s191 = scalar_select %p190, %s189, 63
      %s192 = smul.addr %s191, 8
      %s193 = scalar_lea.vmem %s3, %s192
      %s194 = smul.u32 32, %s14
      %p195 = scmp.lt.s32.totalorder %s194, 63
      %s196 = scalar_select %p195, %s194, 63
      %s197 = smul.addr %s196, 8
      %s198 = scalar_lea.vmem %s0, %s197
      %s199 = smul.u32 32, %s14
      %s200 = smul.u32 32, %s14
      %p201 = scmp.lt.s32.totalorder %s200, 63
      %s202 = scalar_select %p201, %s200, 63
      %s203 = smul.addr %s202, 8
      %s204 = scalar_lea.vmem %s1, %s203
      %s205 = smul.u32 32, %s14
      %s206 = smul.u32 32, %s14
      %p207 = scmp.lt.s32.totalorder %s206, 63
      %s208 = scalar_select %p207, %s206, 63
      %s209 = smul.addr %s208, 8
      %s210 = scalar_lea.vmem %s2, %s209
      %s211 = smul.u32 32, %s14
      %s212 = smul.u32 32, %s14
      %p213 = scmp.lt.s32.totalorder %s212, 63
      %s214 = scalar_select %p213, %s212, 63
      %s215 = smul.addr %s214, 8
      %s216 = scalar_lea.vmem %s3, %s215
      %s217 = smul.u32 32, %s14
      %v218 = vld [vmem:[%s198] sm:$0xff]
      %v219 = vld [vmem:[%s198 + $0x8] sm:$0xff]
      %v220 = vld [vmem:[%s198 + $0x10] sm:$0xff]
      %v221 = vld [vmem:[%s198 + $0x18] sm:$0xff]
      %v222 = vld [vmem:[%s198 + $0x20] sm:$0xff]
      %v223 = vld [vmem:[%s198 + $0x28] sm:$0xff]
      %v224 = vld [vmem:[%s198 + $0x30] sm:$0xff]
      %v225 = vld [vmem:[%s198 + $0x38] sm:$0xff]
      %v226 = vld [vmem:[%s198 + $0x40] sm:$0xff]
      %v227 = vld [vmem:[%s198 + $0x48] sm:$0xff]
      %v228 = vld [vmem:[%s198 + $0x50] sm:$0xff]
      %v229 = vld [vmem:[%s198 + $0x58] sm:$0xff]
      %v230 = vld [vmem:[%s198 + $0x60] sm:$0xff]
      %v231 = vld [vmem:[%s198 + $0x68] sm:$0xff]
      %v232 = vld [vmem:[%s198 + $0x70] sm:$0xff]
      %v233 = vld [vmem:[%s198 + $0x78] sm:$0xff]
      %v234 = vld [vmem:[%s198 + $0x80] sm:$0xff]
      %v235 = vld [vmem:[%s198 + $0x88] sm:$0xff]
      %v236 = vld [vmem:[%s198 + $0x90] sm:$0xff]
      %v237 = vld [vmem:[%s198 + $0x98] sm:$0xff]
      %v238 = vld [vmem:[%s198 + $0xa0] sm:$0xff]
      %v239 = vld [vmem:[%s198 + $0xa8] sm:$0xff]
      %v240 = vld [vmem:[%s198 + $0xb0] sm:$0xff]
      %v241 = vld [vmem:[%s198 + $0xb8] sm:$0xff]
      %v242 = vld [vmem:[%s198 + $0xc0] sm:$0xff]
      %v243 = vld [vmem:[%s198 + $0xc8] sm:$0xff]
      %v244 = vld [vmem:[%s198 + $0xd0] sm:$0xff]
      %v245 = vld [vmem:[%s198 + $0xd8] sm:$0xff]
      %v246 = vld [vmem:[%s198 + $0xe0] sm:$0xff]
      %v247 = vld [vmem:[%s198 + $0xe8] sm:$0xff]
      %v248 = vld [vmem:[%s198 + $0xf0] sm:$0xff]
      %v249 = vld [vmem:[%s198 + $0xf8] sm:$0xff]
      %v250 = vld [vmem:[%s204] sm:$0xff]
      %v251 = vld [vmem:[%s204 + $0x8] sm:$0xff]
      %v252 = vld [vmem:[%s204 + $0x10] sm:$0xff]
      %v253 = vld [vmem:[%s204 + $0x18] sm:$0xff]
      %v254 = vld [vmem:[%s204 + $0x20] sm:$0xff]
      %v255 = vld [vmem:[%s204 + $0x28] sm:$0xff]
      %v256 = vld [vmem:[%s204 + $0x30] sm:$0xff]
      %v257 = vld [vmem:[%s204 + $0x38] sm:$0xff]
      %v258 = vld [vmem:[%s204 + $0x40] sm:$0xff]
      %v259 = vld [vmem:[%s204 + $0x48] sm:$0xff]
      %v260 = vld [vmem:[%s204 + $0x50] sm:$0xff]
      %v261 = vld [vmem:[%s204 + $0x58] sm:$0xff]
      %v262 = vld [vmem:[%s204 + $0x60] sm:$0xff]
      %v263 = vld [vmem:[%s204 + $0x68] sm:$0xff]
      %v264 = vld [vmem:[%s204 + $0x70] sm:$0xff]
      %v265 = vld [vmem:[%s204 + $0x78] sm:$0xff]
      %v266 = vld [vmem:[%s204 + $0x80] sm:$0xff]
      %v267 = vld [vmem:[%s204 + $0x88] sm:$0xff]
      %v268 = vld [vmem:[%s204 + $0x90] sm:$0xff]
      %v269 = vld [vmem:[%s204 + $0x98] sm:$0xff]
      %v270 = vld [vmem:[%s204 + $0xa0] sm:$0xff]
      %v271 = vld [vmem:[%s204 + $0xa8] sm:$0xff]
      %v272 = vld [vmem:[%s204 + $0xb0] sm:$0xff]
      %v273 = vld [vmem:[%s204 + $0xb8] sm:$0xff]
      %v274 = vld [vmem:[%s204 + $0xc0] sm:$0xff]
      %v275 = vld [vmem:[%s204 + $0xc8] sm:$0xff]
      %v276 = vld [vmem:[%s204 + $0xd0] sm:$0xff]
      %v277 = vld [vmem:[%s204 + $0xd8] sm:$0xff]
      %v278 = vld [vmem:[%s204 + $0xe0] sm:$0xff]
      %v279 = vld [vmem:[%s204 + $0xe8] sm:$0xff]
      %v280 = vld [vmem:[%s204 + $0xf0] sm:$0xff]
      %v281 = vld [vmem:[%s204 + $0xf8] sm:$0xff]
      %283 = vset.pattern.permute.xlu0 0
      %284 = vperm.xlu0 %283, %v218
      %v285 = vpop.permute.xlu0 %284
      %288 = vset.pattern.permute.xlu0 0
      %289 = vperm.xlu0 %288, %v219
      %v290 = vpop.permute.xlu0 %289
      %293 = vset.pattern.permute.xlu0 0
      %294 = vperm.xlu0 %293, %v220
      %v295 = vpop.permute.xlu0 %294
      %298 = vset.pattern.permute.xlu0 0
      %299 = vperm.xlu0 %298, %v221
      %v300 = vpop.permute.xlu0 %299
      %303 = vset.pattern.permute.xlu0 0
      %304 = vperm.xlu0 %303, %v222
      %v305 = vpop.permute.xlu0 %304
      %308 = vset.pattern.permute.xlu0 0
      %309 = vperm.xlu0 %308, %v223
      %v310 = vpop.permute.xlu0 %309
      %313 = vset.pattern.permute.xlu0 0
      %314 = vperm.xlu0 %313, %v224
      %v315 = vpop.permute.xlu0 %314
      %318 = vset.pattern.permute.xlu0 0
      %319 = vperm.xlu0 %318, %v225
      %v320 = vpop.permute.xlu0 %319
      %323 = vset.pattern.permute.xlu0 0
      %324 = vperm.xlu0 %323, %v226
      %v325 = vpop.permute.xlu0 %324
      %328 = vset.pattern.permute.xlu0 0
      %329 = vperm.xlu0 %328, %v227
      %v330 = vpop.permute.xlu0 %329
      %333 = vset.pattern.permute.xlu0 0
      %334 = vperm.xlu0 %333, %v228
      %v335 = vpop.permute.xlu0 %334
      %338 = vset.pattern.permute.xlu0 0
      %339 = vperm.xlu0 %338, %v229
      %v340 = vpop.permute.xlu0 %339
      %343 = vset.pattern.permute.xlu0 0
      %344 = vperm.xlu0 %343, %v230
      %v345 = vpop.permute.xlu0 %344
      %348 = vset.pattern.permute.xlu0 0
      %349 = vperm.xlu0 %348, %v231
      %v350 = vpop.permute.xlu0 %349
      %353 = vset.pattern.permute.xlu0 0
      %354 = vperm.xlu0 %353, %v232
      %v355 = vpop.permute.xlu0 %354
      %358 = vset.pattern.permute.xlu0 0
      %359 = vperm.xlu0 %358, %v233
      %v360 = vpop.permute.xlu0 %359
      %363 = vset.pattern.permute.xlu0 0
      %364 = vperm.xlu0 %363, %v234
      %v365 = vpop.permute.xlu0 %364
      %368 = vset.pattern.permute.xlu0 0
      %369 = vperm.xlu0 %368, %v235
      %v370 = vpop.permute.xlu0 %369
      %373 = vset.pattern.permute.xlu0 0
      %374 = vperm.xlu0 %373, %v236
      %v375 = vpop.permute.xlu0 %374
      %378 = vset.pattern.permute.xlu0 0
      %379 = vperm.xlu0 %378, %v237
      %v380 = vpop.permute.xlu0 %379
      %383 = vset.pattern.permute.xlu0 0
      %384 = vperm.xlu0 %383, %v238
      %v385 = vpop.permute.xlu0 %384
      %388 = vset.pattern.permute.xlu0 0
      %389 = vperm.xlu0 %388, %v239
      %v390 = vpop.permute.xlu0 %389
      %393 = vset.pattern.permute.xlu0 0
      %394 = vperm.xlu0 %393, %v240
      %v395 = vpop.permute.xlu0 %394
      %398 = vset.pattern.permute.xlu0 0
      %399 = vperm.xlu0 %398, %v241
      %v400 = vpop.permute.xlu0 %399
      %403 = vset.pattern.permute.xlu0 0
      %404 = vperm.xlu0 %403, %v242
      %v405 = vpop.permute.xlu0 %404
      %408 = vset.pattern.permute.xlu0 0
      %409 = vperm.xlu0 %408, %v243
      %v410 = vpop.permute.xlu0 %409
      %413 = vset.pattern.permute.xlu0 0
      %414 = vperm.xlu0 %413, %v244
      %v415 = vpop.permute.xlu0 %414
      %418 = vset.pattern.permute.xlu0 0
      %419 = vperm.xlu0 %418, %v245
      %v420 = vpop.permute.xlu0 %419
      %423 = vset.pattern.permute.xlu0 0
      %424 = vperm.xlu0 %423, %v246
      %v425 = vpop.permute.xlu0 %424
      %428 = vset.pattern.permute.xlu0 0
      %429 = vperm.xlu0 %428, %v247
      %v430 = vpop.permute.xlu0 %429
      %433 = vset.pattern.permute.xlu0 0
      %434 = vperm.xlu0 %433, %v248
      %v435 = vpop.permute.xlu0 %434
      %438 = vset.pattern.permute.xlu0 0
      %439 = vperm.xlu0 %438, %v249
      %v440 = vpop.permute.xlu0 %439
      %v442 = vmul.f32 %v285, %v250
      %v443 = vmul.f32 %v290, %v251
      %v444 = vmul.f32 %v295, %v252
      %v445 = vmul.f32 %v300, %v253
      %v446 = vmul.f32 %v305, %v254
      %v447 = vmul.f32 %v310, %v255
      %v448 = vmul.f32 %v315, %v256
      %v449 = vmul.f32 %v320, %v257
      %v450 = vmul.f32 %v325, %v258
      %v451 = vmul.f32 %v330, %v259
      %v452 = vmul.f32 %v335, %v260
      %v453 = vmul.f32 %v340, %v261
      %v454 = vmul.f32 %v345, %v262
      %v455 = vmul.f32 %v350, %v263
      %v456 = vmul.f32 %v355, %v264
      %v457 = vmul.f32 %v360, %v265
      %v458 = vmul.f32 %v365, %v266
      %v459 = vmul.f32 %v370, %v267
      %v460 = vmul.f32 %v375, %v268
      %v461 = vmul.f32 %v380, %v269
      %v462 = vmul.f32 %v385, %v270
      %v463 = vmul.f32 %v390, %v271
      %v464 = vmul.f32 %v395, %v272
      %v465 = vmul.f32 %v400, %v273
      %v466 = vmul.f32 %v405, %v274
      %v467 = vmul.f32 %v410, %v275
      %v468 = vmul.f32 %v415, %v276
      %v469 = vmul.f32 %v420, %v277
      %v470 = vmul.f32 %v425, %v278
      %v471 = vmul.f32 %v430, %v279
      %v472 = vmul.f32 %v435, %v280
      %v473 = vmul.f32 %v440, %v281
      %v474 = vld [vmem:[%s210] sm:$0xff]
      %v475 = vld [vmem:[%s210 + $0x8] sm:$0xff]
      %v476 = vld [vmem:[%s210 + $0x10] sm:$0xff]
      %v477 = vld [vmem:[%s210 + $0x18] sm:$0xff]
      %v478 = vld [vmem:[%s210 + $0x20] sm:$0xff]
      %v479 = vld [vmem:[%s210 + $0x28] sm:$0xff]
      %v480 = vld [vmem:[%s210 + $0x30] sm:$0xff]
      %v481 = vld [vmem:[%s210 + $0x38] sm:$0xff]
      %v482 = vld [vmem:[%s210 + $0x40] sm:$0xff]
      %v483 = vld [vmem:[%s210 + $0x48] sm:$0xff]
      %v484 = vld [vmem:[%s210 + $0x50] sm:$0xff]
      %v485 = vld [vmem:[%s210 + $0x58] sm:$0xff]
      %v486 = vld [vmem:[%s210 + $0x60] sm:$0xff]
      %v487 = vld [vmem:[%s210 + $0x68] sm:$0xff]
      %v488 = vld [vmem:[%s210 + $0x70] sm:$0xff]
      %v489 = vld [vmem:[%s210 + $0x78] sm:$0xff]
      %v490 = vld [vmem:[%s210 + $0x80] sm:$0xff]
      %v491 = vld [vmem:[%s210 + $0x88] sm:$0xff]
      %v492 = vld [vmem:[%s210 + $0x90] sm:$0xff]
      %v493 = vld [vmem:[%s210 + $0x98] sm:$0xff]
      %v494 = vld [vmem:[%s210 + $0xa0] sm:$0xff]
      %v495 = vld [vmem:[%s210 + $0xa8] sm:$0xff]
      %v496 = vld [vmem:[%s210 + $0xb0] sm:$0xff]
      %v497 = vld [vmem:[%s210 + $0xb8] sm:$0xff]
      %v498 = vld [vmem:[%s210 + $0xc0] sm:$0xff]
      %v499 = vld [vmem:[%s210 + $0xc8] sm:$0xff]
      %v500 = vld [vmem:[%s210 + $0xd0] sm:$0xff]
      %v501 = vld [vmem:[%s210 + $0xd8] sm:$0xff]
      %v502 = vld [vmem:[%s210 + $0xe0] sm:$0xff]
      %v503 = vld [vmem:[%s210 + $0xe8] sm:$0xff]
      %v504 = vld [vmem:[%s210 + $0xf0] sm:$0xff]
      %v505 = vld [vmem:[%s210 + $0xf8] sm:$0xff]
      %v506 = vsub.f32 1.0, %v218
      %v507 = vsub.f32 1.0, %v219
      %v508 = vsub.f32 1.0, %v220
      %v509 = vsub.f32 1.0, %v221
      %v510 = vsub.f32 1.0, %v222
      %v511 = vsub.f32 1.0, %v223
      %v512 = vsub.f32 1.0, %v224
      %v513 = vsub.f32 1.0, %v225
      %v514 = vsub.f32 1.0, %v226
      %v515 = vsub.f32 1.0, %v227
      %v516 = vsub.f32 1.0, %v228
      %v517 = vsub.f32 1.0, %v229
      %v518 = vsub.f32 1.0, %v230
      %v519 = vsub.f32 1.0, %v231
      %v520 = vsub.f32 1.0, %v232
      %v521 = vsub.f32 1.0, %v233
      %v522 = vsub.f32 1.0, %v234
      %v523 = vsub.f32 1.0, %v235
      %v524 = vsub.f32 1.0, %v236
      %v525 = vsub.f32 1.0, %v237
      %v526 = vsub.f32 1.0, %v238
      %v527 = vsub.f32 1.0, %v239
      %v528 = vsub.f32 1.0, %v240
      %v529 = vsub.f32 1.0, %v241
      %v530 = vsub.f32 1.0, %v242
      %v531 = vsub.f32 1.0, %v243
      %v532 = vsub.f32 1.0, %v244
      %v533 = vsub.f32 1.0, %v245
      %v534 = vsub.f32 1.0, %v246
      %v535 = vsub.f32 1.0, %v247
      %v536 = vsub.f32 1.0, %v248
      %v537 = vsub.f32 1.0, %v249
      %v538 = vmul.f32 %v218, %v506
      %v539 = vmul.f32 %v219, %v507
      %v540 = vmul.f32 %v220, %v508
      %v541 = vmul.f32 %v221, %v509
      %v542 = vmul.f32 %v222, %v510
      %v543 = vmul.f32 %v223, %v511
      %v544 = vmul.f32 %v224, %v512
      %v545 = vmul.f32 %v225, %v513
      %v546 = vmul.f32 %v226, %v514
      %v547 = vmul.f32 %v227, %v515
      %v548 = vmul.f32 %v228, %v516
      %v549 = vmul.f32 %v229, %v517
      %v550 = vmul.f32 %v230, %v518
      %v551 = vmul.f32 %v231, %v519
      %v552 = vmul.f32 %v232, %v520
      %v553 = vmul.f32 %v233, %v521
      %v554 = vmul.f32 %v234, %v522
      %v555 = vmul.f32 %v235, %v523
      %v556 = vmul.f32 %v236, %v524
      %v557 = vmul.f32 %v237, %v525
      %v558 = vmul.f32 %v238, %v526
      %v559 = vmul.f32 %v239, %v527
      %v560 = vmul.f32 %v240, %v528
      %v561 = vmul.f32 %v241, %v529
      %v562 = vmul.f32 %v242, %v530
      %v563 = vmul.f32 %v243, %v531
      %v564 = vmul.f32 %v244, %v532
      %v565 = vmul.f32 %v245, %v533
      %v566 = vmul.f32 %v246, %v534
      %v567 = vmul.f32 %v247, %v535
      %v568 = vmul.f32 %v248, %v536
      %v569 = vmul.f32 %v249, %v537
      %v570 = vrsqrt.pop %v538
      %v571 = vmul.f32 %v538, %v570
      %vm572 = vcmp.eq.f32.partialorder %v538, inf
      %v573 = vsel %vm572, %v538, %v571
      %vm574 = vcmp.eq.f32.partialorder %v538, 0.0
      %v575 = vand.u32 %v538, 2147483648
      %v576 = vsel %vm574, %v575, %v573
      %v577 = vrsqrt.pop %v539
      %v578 = vmul.f32 %v539, %v577
      %vm579 = vcmp.eq.f32.partialorder %v539, inf
      %v580 = vsel %vm579, %v539, %v578
      %vm581 = vcmp.eq.f32.partialorder %v539, 0.0
      %v582 = vand.u32 %v539, 2147483648
      %v583 = vsel %vm581, %v582, %v580
      %v584 = vrsqrt.pop %v540
      %v585 = vmul.f32 %v540, %v584
      %vm586 = vcmp.eq.f32.partialorder %v540, inf
      %v587 = vsel %vm586, %v540, %v585
      %vm588 = vcmp.eq.f32.partialorder %v540, 0.0
      %v589 = vand.u32 %v540, 2147483648
      %v590 = vsel %vm588, %v589, %v587
      %v591 = vrsqrt.pop %v541
      %v592 = vmul.f32 %v541, %v591
      %vm593 = vcmp.eq.f32.partialorder %v541, inf
      %v594 = vsel %vm593, %v541, %v592
      %vm595 = vcmp.eq.f32.partialorder %v541, 0.0
      %v596 = vand.u32 %v541, 2147483648
      %v597 = vsel %vm595, %v596, %v594
      %v598 = vrsqrt.pop %v542
      %v599 = vmul.f32 %v542, %v598
      %vm600 = vcmp.eq.f32.partialorder %v542, inf
      %v601 = vsel %vm600, %v542, %v599
      %vm602 = vcmp.eq.f32.partialorder %v542, 0.0
      %v603 = vand.u32 %v542, 2147483648
      %v604 = vsel %vm602, %v603, %v601
      %v605 = vrsqrt.pop %v543
      %v606 = vmul.f32 %v543, %v605
      %vm607 = vcmp.eq.f32.partialorder %v543, inf
      %v608 = vsel %vm607, %v543, %v606
      %vm609 = vcmp.eq.f32.partialorder %v543, 0.0
      %v610 = vand.u32 %v543, 2147483648
      %v611 = vsel %vm609, %v610, %v608
      %v612 = vrsqrt.pop %v544
      %v613 = vmul.f32 %v544, %v612
      %vm614 = vcmp.eq.f32.partialorder %v544, inf
      %v615 = vsel %vm614, %v544, %v613
      %vm616 = vcmp.eq.f32.partialorder %v544, 0.0
      %v617 = vand.u32 %v544, 2147483648
      %v618 = vsel %vm616, %v617, %v615
      %v619 = vrsqrt.pop %v545
      %v620 = vmul.f32 %v545, %v619
      %vm621 = vcmp.eq.f32.partialorder %v545, inf
      %v622 = vsel %vm621, %v545, %v620
      %vm623 = vcmp.eq.f32.partialorder %v545, 0.0
      %v624 = vand.u32 %v545, 2147483648
      %v625 = vsel %vm623, %v624, %v622
      %v626 = vrsqrt.pop %v546
      %v627 = vmul.f32 %v546, %v626
      %vm628 = vcmp.eq.f32.partialorder %v546, inf
      %v629 = vsel %vm628, %v546, %v627
      %vm630 = vcmp.eq.f32.partialorder %v546, 0.0
      %v631 = vand.u32 %v546, 2147483648
      %v632 = vsel %vm630, %v631, %v629
      %v633 = vrsqrt.pop %v547
      %v634 = vmul.f32 %v547, %v633
      %vm635 = vcmp.eq.f32.partialorder %v547, inf
      %v636 = vsel %vm635, %v547, %v634
      %vm637 = vcmp.eq.f32.partialorder %v547, 0.0
      %v638 = vand.u32 %v547, 2147483648
      %v639 = vsel %vm637, %v638, %v636
      %v640 = vrsqrt.pop %v548
      %v641 = vmul.f32 %v548, %v640
      %vm642 = vcmp.eq.f32.partialorder %v548, inf
      %v643 = vsel %vm642, %v548, %v641
      %vm644 = vcmp.eq.f32.partialorder %v548, 0.0
      %v645 = vand.u32 %v548, 2147483648
      %v646 = vsel %vm644, %v645, %v643
      %v647 = vrsqrt.pop %v549
      %v648 = vmul.f32 %v549, %v647
      %vm649 = vcmp.eq.f32.partialorder %v549, inf
      %v650 = vsel %vm649, %v549, %v648
      %vm651 = vcmp.eq.f32.partialorder %v549, 0.0
      %v652 = vand.u32 %v549, 2147483648
      %v653 = vsel %vm651, %v652, %v650
      %v654 = vrsqrt.pop %v550
      %v655 = vmul.f32 %v550, %v654
      %vm656 = vcmp.eq.f32.partialorder %v550, inf
      %v657 = vsel %vm656, %v550, %v655
      %vm658 = vcmp.eq.f32.partialorder %v550, 0.0
      %v659 = vand.u32 %v550, 2147483648
      %v660 = vsel %vm658, %v659, %v657
      %v661 = vrsqrt.pop %v551
      %v662 = vmul.f32 %v551, %v661
      %vm663 = vcmp.eq.f32.partialorder %v551, inf
      %v664 = vsel %vm663, %v551, %v662
      %vm665 = vcmp.eq.f32.partialorder %v551, 0.0
      %v666 = vand.u32 %v551, 2147483648
      %v667 = vsel %vm665, %v666, %v664
      %v668 = vrsqrt.pop %v552
      %v669 = vmul.f32 %v552, %v668
      %vm670 = vcmp.eq.f32.partialorder %v552, inf
      %v671 = vsel %vm670, %v552, %v669
      %vm672 = vcmp.eq.f32.partialorder %v552, 0.0
      %v673 = vand.u32 %v552, 2147483648
      %v674 = vsel %vm672, %v673, %v671
      %v675 = vrsqrt.pop %v553
      %v676 = vmul.f32 %v553, %v675
      %vm677 = vcmp.eq.f32.partialorder %v553, inf
      %v678 = vsel %vm677, %v553, %v676
      %vm679 = vcmp.eq.f32.partialorder %v553, 0.0
      %v680 = vand.u32 %v553, 2147483648
      %v681 = vsel %vm679, %v680, %v678
      %v682 = vrsqrt.pop %v554
      %v683 = vmul.f32 %v554, %v682
      %vm684 = vcmp.eq.f32.partialorder %v554, inf
      %v685 = vsel %vm684, %v554, %v683
      %vm686 = vcmp.eq.f32.partialorder %v554, 0.0
      %v687 = vand.u32 %v554, 2147483648
      %v688 = vsel %vm686, %v687, %v685
      %v689 = vrsqrt.pop %v555
      %v690 = vmul.f32 %v555, %v689
      %vm691 = vcmp.eq.f32.partialorder %v555, inf
      %v692 = vsel %vm691, %v555, %v690
      %vm693 = vcmp.eq.f32.partialorder %v555, 0.0
      %v694 = vand.u32 %v555, 2147483648
      %v695 = vsel %vm693, %v694, %v692
      %v696 = vrsqrt.pop %v556
      %v697 = vmul.f32 %v556, %v696
      %vm698 = vcmp.eq.f32.partialorder %v556, inf
      %v699 = vsel %vm698, %v556, %v697
      %vm700 = vcmp.eq.f32.partialorder %v556, 0.0
      %v701 = vand.u32 %v556, 2147483648
      %v702 = vsel %vm700, %v701, %v699
      %v703 = vrsqrt.pop %v557
      %v704 = vmul.f32 %v557, %v703
      %vm705 = vcmp.eq.f32.partialorder %v557, inf
      %v706 = vsel %vm705, %v557, %v704
      %vm707 = vcmp.eq.f32.partialorder %v557, 0.0
      %v708 = vand.u32 %v557, 2147483648
      %v709 = vsel %vm707, %v708, %v706
      %v710 = vrsqrt.pop %v558
      %v711 = vmul.f32 %v558, %v710
      %vm712 = vcmp.eq.f32.partialorder %v558, inf
      %v713 = vsel %vm712, %v558, %v711
      %vm714 = vcmp.eq.f32.partialorder %v558, 0.0
      %v715 = vand.u32 %v558, 2147483648
      %v716 = vsel %vm714, %v715, %v713
      %v717 = vrsqrt.pop %v559
      %v718 = vmul.f32 %v559, %v717
      %vm719 = vcmp.eq.f32.partialorder %v559, inf
      %v720 = vsel %vm719, %v559, %v718
      %vm721 = vcmp.eq.f32.partialorder %v559, 0.0
      %v722 = vand.u32 %v559, 2147483648
      %v723 = vsel %vm721, %v722, %v720
      %v724 = vrsqrt.pop %v560
      %v725 = vmul.f32 %v560, %v724
      %vm726 = vcmp.eq.f32.partialorder %v560, inf
      %v727 = vsel %vm726, %v560, %v725
      %vm728 = vcmp.eq.f32.partialorder %v560, 0.0
      %v729 = vand.u32 %v560, 2147483648
      %v730 = vsel %vm728, %v729, %v727
      %v731 = vrsqrt.pop %v561
      %v732 = vmul.f32 %v561, %v731
      %vm733 = vcmp.eq.f32.partialorder %v561, inf
      %v734 = vsel %vm733, %v561, %v732
      %vm735 = vcmp.eq.f32.partialorder %v561, 0.0
      %v736 = vand.u32 %v561, 2147483648
      %v737 = vsel %vm735, %v736, %v734
      %v738 = vrsqrt.pop %v562
      %v739 = vmul.f32 %v562, %v738
      %vm740 = vcmp.eq.f32.partialorder %v562, inf
      %v741 = vsel %vm740, %v562, %v739
      %vm742 = vcmp.eq.f32.partialorder %v562, 0.0
      %v743 = vand.u32 %v562, 2147483648
      %v744 = vsel %vm742, %v743, %v741
      %v745 = vrsqrt.pop %v563
      %v746 = vmul.f32 %v563, %v745
      %vm747 = vcmp.eq.f32.partialorder %v563, inf
      %v748 = vsel %vm747, %v563, %v746
      %vm749 = vcmp.eq.f32.partialorder %v563, 0.0
      %v750 = vand.u32 %v563, 2147483648
      %v751 = vsel %vm749, %v750, %v748
      %v752 = vrsqrt.pop %v564
      %v753 = vmul.f32 %v564, %v752
      %vm754 = vcmp.eq.f32.partialorder %v564, inf
      %v755 = vsel %vm754, %v564, %v753
      %vm756 = vcmp.eq.f32.partialorder %v564, 0.0
      %v757 = vand.u32 %v564, 2147483648
      %v758 = vsel %vm756, %v757, %v755
      %v759 = vrsqrt.pop %v565
      %v760 = vmul.f32 %v565, %v759
      %vm761 = vcmp.eq.f32.partialorder %v565, inf
      %v762 = vsel %vm761, %v565, %v760
      %vm763 = vcmp.eq.f32.partialorder %v565, 0.0
      %v764 = vand.u32 %v565, 2147483648
      %v765 = vsel %vm763, %v764, %v762
      %v766 = vrsqrt.pop %v566
      %v767 = vmul.f32 %v566, %v766
      %vm768 = vcmp.eq.f32.partialorder %v566, inf
      %v769 = vsel %vm768, %v566, %v767
      %vm770 = vcmp.eq.f32.partialorder %v566, 0.0
      %v771 = vand.u32 %v566, 2147483648
      %v772 = vsel %vm770, %v771, %v769
      %v773 = vrsqrt.pop %v567
      %v774 = vmul.f32 %v567, %v773
      %vm775 = vcmp.eq.f32.partialorder %v567, inf
      %v776 = vsel %vm775, %v567, %v774
      %vm777 = vcmp.eq.f32.partialorder %v567, 0.0
      %v778 = vand.u32 %v567, 2147483648
      %v779 = vsel %vm777, %v778, %v776
      %v780 = vrsqrt.pop %v568
      %v781 = vmul.f32 %v568, %v780
      %vm782 = vcmp.eq.f32.partialorder %v568, inf
      %v783 = vsel %vm782, %v568, %v781
      %vm784 = vcmp.eq.f32.partialorder %v568, 0.0
      %v785 = vand.u32 %v568, 2147483648
      %v786 = vsel %vm784, %v785, %v783
      %v787 = vrsqrt.pop %v569
      %v788 = vmul.f32 %v569, %v787
      %vm789 = vcmp.eq.f32.partialorder %v569, inf
      %v790 = vsel %vm789, %v569, %v788
      %vm791 = vcmp.eq.f32.partialorder %v569, 0.0
      %v792 = vand.u32 %v569, 2147483648
      %v793 = vsel %vm791, %v792, %v790
      %795 = vset.pattern.permute.xlu0 0
      %796 = vperm.xlu0 %795, %v576
      %v797 = vpop.permute.xlu0 %796
      %800 = vset.pattern.permute.xlu0 0
      %801 = vperm.xlu0 %800, %v583
      %v802 = vpop.permute.xlu0 %801
      %805 = vset.pattern.permute.xlu0 0
      %806 = vperm.xlu0 %805, %v590
      %v807 = vpop.permute.xlu0 %806
      %810 = vset.pattern.permute.xlu0 0
      %811 = vperm.xlu0 %810, %v597
      %v812 = vpop.permute.xlu0 %811
      %815 = vset.pattern.permute.xlu0 0
      %816 = vperm.xlu0 %815, %v604
      %v817 = vpop.permute.xlu0 %816
      %820 = vset.pattern.permute.xlu0 0
      %821 = vperm.xlu0 %820, %v611
      %v822 = vpop.permute.xlu0 %821
      %825 = vset.pattern.permute.xlu0 0
      %826 = vperm.xlu0 %825, %v618
      %v827 = vpop.permute.xlu0 %826
      %830 = vset.pattern.permute.xlu0 0
      %831 = vperm.xlu0 %830, %v625
      %v832 = vpop.permute.xlu0 %831
      %835 = vset.pattern.permute.xlu0 0
      %836 = vperm.xlu0 %835, %v632
      %v837 = vpop.permute.xlu0 %836
      %840 = vset.pattern.permute.xlu0 0
      %841 = vperm.xlu0 %840, %v639
      %v842 = vpop.permute.xlu0 %841
      %845 = vset.pattern.permute.xlu0 0
      %846 = vperm.xlu0 %845, %v646
      %v847 = vpop.permute.xlu0 %846
      %850 = vset.pattern.permute.xlu0 0
      %851 = vperm.xlu0 %850, %v653
      %v852 = vpop.permute.xlu0 %851
      %855 = vset.pattern.permute.xlu0 0
      %856 = vperm.xlu0 %855, %v660
      %v857 = vpop.permute.xlu0 %856
      %860 = vset.pattern.permute.xlu0 0
      %861 = vperm.xlu0 %860, %v667
      %v862 = vpop.permute.xlu0 %861
      %865 = vset.pattern.permute.xlu0 0
      %866 = vperm.xlu0 %865, %v674
      %v867 = vpop.permute.xlu0 %866
      %870 = vset.pattern.permute.xlu0 0
      %871 = vperm.xlu0 %870, %v681
      %v872 = vpop.permute.xlu0 %871
      %875 = vset.pattern.permute.xlu0 0
      %876 = vperm.xlu0 %875, %v688
      %v877 = vpop.permute.xlu0 %876
      %880 = vset.pattern.permute.xlu0 0
      %881 = vperm.xlu0 %880, %v695
      %v882 = vpop.permute.xlu0 %881
      %885 = vset.pattern.permute.xlu0 0
      %886 = vperm.xlu0 %885, %v702
      %v887 = vpop.permute.xlu0 %886
      %890 = vset.pattern.permute.xlu0 0
      %891 = vperm.xlu0 %890, %v709
      %v892 = vpop.permute.xlu0 %891
      %895 = vset.pattern.permute.xlu0 0
      %896 = vperm.xlu0 %895, %v716
      %v897 = vpop.permute.xlu0 %896
      %900 = vset.pattern.permute.xlu0 0
      %901 = vperm.xlu0 %900, %v723
      %v902 = vpop.permute.xlu0 %901
      %905 = vset.pattern.permute.xlu0 0
      %906 = vperm.xlu0 %905, %v730
      %v907 = vpop.permute.xlu0 %906
      %910 = vset.pattern.permute.xlu0 0
      %911 = vperm.xlu0 %910, %v737
      %v912 = vpop.permute.xlu0 %911
      %915 = vset.pattern.permute.xlu0 0
      %916 = vperm.xlu0 %915, %v744
      %v917 = vpop.permute.xlu0 %916
      %920 = vset.pattern.permute.xlu0 0
      %921 = vperm.xlu0 %920, %v751
      %v922 = vpop.permute.xlu0 %921
      %925 = vset.pattern.permute.xlu0 0
      %926 = vperm.xlu0 %925, %v758
      %v927 = vpop.permute.xlu0 %926
      %930 = vset.pattern.permute.xlu0 0
      %931 = vperm.xlu0 %930, %v765
      %v932 = vpop.permute.xlu0 %931
      %935 = vset.pattern.permute.xlu0 0
      %936 = vperm.xlu0 %935, %v772
      %v937 = vpop.permute.xlu0 %936
      %940 = vset.pattern.permute.xlu0 0
      %941 = vperm.xlu0 %940, %v779
      %v942 = vpop.permute.xlu0 %941
      %945 = vset.pattern.permute.xlu0 0
      %946 = vperm.xlu0 %945, %v786
      %v947 = vpop.permute.xlu0 %946
      %950 = vset.pattern.permute.xlu0 0
      %951 = vperm.xlu0 %950, %v793
      %v952 = vpop.permute.xlu0 %951
      %v954 = vmul.f32 %v474, %v797
      %v955 = vmul.f32 %v475, %v802
      %v956 = vmul.f32 %v476, %v807
      %v957 = vmul.f32 %v477, %v812
      %v958 = vmul.f32 %v478, %v817
      %v959 = vmul.f32 %v479, %v822
      %v960 = vmul.f32 %v480, %v827
      %v961 = vmul.f32 %v481, %v832
      %v962 = vmul.f32 %v482, %v837
      %v963 = vmul.f32 %v483, %v842
      %v964 = vmul.f32 %v484, %v847
      %v965 = vmul.f32 %v485, %v852
      %v966 = vmul.f32 %v486, %v857
      %v967 = vmul.f32 %v487, %v862
      %v968 = vmul.f32 %v488, %v867
      %v969 = vmul.f32 %v489, %v872
      %v970 = vmul.f32 %v490, %v877
      %v971 = vmul.f32 %v491, %v882
      %v972 = vmul.f32 %v492, %v887
      %v973 = vmul.f32 %v493, %v892
      %v974 = vmul.f32 %v494, %v897
      %v975 = vmul.f32 %v495, %v902
      %v976 = vmul.f32 %v496, %v907
      %v977 = vmul.f32 %v497, %v912
      %v978 = vmul.f32 %v498, %v917
      %v979 = vmul.f32 %v499, %v922
      %v980 = vmul.f32 %v500, %v927
      %v981 = vmul.f32 %v501, %v932
      %v982 = vmul.f32 %v502, %v937
      %v983 = vmul.f32 %v503, %v942
      %v984 = vmul.f32 %v504, %v947
      %v985 = vmul.f32 %v505, %v952
      %v986 = vadd.f32 %v442, %v954
      %v987 = vadd.f32 %v443, %v955
      %v988 = vadd.f32 %v444, %v956
      %v989 = vadd.f32 %v445, %v957
      %v990 = vadd.f32 %v446, %v958
      %v991 = vadd.f32 %v447, %v959
      %v992 = vadd.f32 %v448, %v960
      %v993 = vadd.f32 %v449, %v961
      %v994 = vadd.f32 %v450, %v962
      %v995 = vadd.f32 %v451, %v963
      %v996 = vadd.f32 %v452, %v964
      %v997 = vadd.f32 %v453, %v965
      %v998 = vadd.f32 %v454, %v966
      %v999 = vadd.f32 %v455, %v967
      %v1000 = vadd.f32 %v456, %v968
      %v1001 = vadd.f32 %v457, %v969
      %v1002 = vadd.f32 %v458, %v970
      %v1003 = vadd.f32 %v459, %v971
      %v1004 = vadd.f32 %v460, %v972
      %v1005 = vadd.f32 %v461, %v973
      %v1006 = vadd.f32 %v462, %v974
      %v1007 = vadd.f32 %v463, %v975
      %v1008 = vadd.f32 %v464, %v976
      %v1009 = vadd.f32 %v465, %v977
      %v1010 = vadd.f32 %v466, %v978
      %v1011 = vadd.f32 %v467, %v979
      %v1012 = vadd.f32 %v468, %v980
      %v1013 = vadd.f32 %v469, %v981
      %v1014 = vadd.f32 %v470, %v982
      %v1015 = vadd.f32 %v471, %v983
      %v1016 = vadd.f32 %v472, %v984
      %v1017 = vadd.f32 %v473, %v985
      %vm1018 = vcmask 261120
      %1019 = vst.msk [vmem:[%s216] sm:$0xff] %vm1018, %v986
      %1020 = vst.msk [vmem:[%s216 + $0x8] sm:$0xff] %vm1018, %v987
      %1021 = vst.msk [vmem:[%s216 + $0x10] sm:$0xff] %vm1018, %v988
      %1022 = vst.msk [vmem:[%s216 + $0x18] sm:$0xff] %vm1018, %v989
      %1023 = vst.msk [vmem:[%s216 + $0x20] sm:$0xff] %vm1018, %v990
      %1024 = vst.msk [vmem:[%s216 + $0x28] sm:$0xff] %vm1018, %v991
      %1025 = vst.msk [vmem:[%s216 + $0x30] sm:$0xff] %vm1018, %v992
      %1026 = vst.msk [vmem:[%s216 + $0x38] sm:$0xff] %vm1018, %v993
      %1027 = vst.msk [vmem:[%s216 + $0x40] sm:$0xff] %vm1018, %v994
      %1028 = vst.msk [vmem:[%s216 + $0x48] sm:$0xff] %vm1018, %v995
      %1029 = vst.msk [vmem:[%s216 + $0x50] sm:$0xff] %vm1018, %v996
      %1030 = vst.msk [vmem:[%s216 + $0x58] sm:$0xff] %vm1018, %v997
      %1031 = vst.msk [vmem:[%s216 + $0x60] sm:$0xff] %vm1018, %v998
      %1032 = vst.msk [vmem:[%s216 + $0x68] sm:$0xff] %vm1018, %v999
      %1033 = vst.msk [vmem:[%s216 + $0x70] sm:$0xff] %vm1018, %v1000
      %1034 = vst.msk [vmem:[%s216 + $0x78] sm:$0xff] %vm1018, %v1001
      %1035 = vst.msk [vmem:[%s216 + $0x80] sm:$0xff] %vm1018, %v1002
      %1036 = vst.msk [vmem:[%s216 + $0x88] sm:$0xff] %vm1018, %v1003
      %1037 = vst.msk [vmem:[%s216 + $0x90] sm:$0xff] %vm1018, %v1004
      %1038 = vst.msk [vmem:[%s216 + $0x98] sm:$0xff] %vm1018, %v1005
      %1039 = vst.msk [vmem:[%s216 + $0xa0] sm:$0xff] %vm1018, %v1006
      %1040 = vst.msk [vmem:[%s216 + $0xa8] sm:$0xff] %vm1018, %v1007
      %1041 = vst.msk [vmem:[%s216 + $0xb0] sm:$0xff] %vm1018, %v1008
      %1042 = vst.msk [vmem:[%s216 + $0xb8] sm:$0xff] %vm1018, %v1009
      %1043 = vst.msk [vmem:[%s216 + $0xc0] sm:$0xff] %vm1018, %v1010
      %1044 = vst.msk [vmem:[%s216 + $0xc8] sm:$0xff] %vm1018, %v1011
      %1045 = vst.msk [vmem:[%s216 + $0xd0] sm:$0xff] %vm1018, %v1012
      %1046 = vst.msk [vmem:[%s216 + $0xd8] sm:$0xff] %vm1018, %v1013
      %1047 = vst.msk [vmem:[%s216 + $0xe0] sm:$0xff] %vm1018, %v1014
      %1048 = vst.msk [vmem:[%s216 + $0xe8] sm:$0xff] %vm1018, %v1015
      %1049 = vst.msk [vmem:[%s216 + $0xf0] sm:$0xff] %vm1018, %v1016
      %1050 = vst.msk [vmem:[%s216 + $0xf8] sm:$0xff] %vm1018, %v1017
      %s1051 = smul.u32 32, %s14
      %p1052 = scmp.lt.s32.totalorder %s1051, 63
      %s1053 = scalar_select %p1052, %s1051, 63
      %s1054 = smul.addr %s1053, 8
      %s1055 = scalar_lea.vmem %s3, %s1054
      // Predicated region
      $region33: #{tpu_custom_call.1} parent=31 // pred_check
        %p1056 = pneg %p110
      $region34: #{tpu_custom_call.1} parent=31 // pred_check_branch
        %1058 = sbr.rel (%p1056) target = $region36
      $region35: #{tpu_custom_call.1} parent=31 // pred_region
        %s1059 = smul.u32 32, %s14
      $region36: #{tpu_custom_call.1} parent=31 // pred_fallthru
        _
    $region32: #{tpu_custom_call.1} parent=5 // pred_fallthru
      _
    %p1060 = scmp.le.s32.totalorder 2, %s9
    // Predicated region
    $region37: #{tpu_custom_call.1} parent=5 // pred_check
      %p1061 = pneg %p1060
    $region38: #{tpu_custom_call.1} parent=5 // pred_check_branch
      %1063 = sbr.rel (%p1061) target = $region40
    $region39: #{tpu_custom_call.1} parent=5 // pred_region
      %s1064 = ssub.s32 %s9, 2
      // Predicated region
      $region41: #{tpu_custom_call.1} parent=39 // pred_check
        %p1065 = pneg %p116
      $region42: #{tpu_custom_call.1} parent=39 // pred_check_branch
        %1067 = sbr.rel (%p1065) target = $region44
      $region43: #{tpu_custom_call.1} parent=39 // pred_region
        %s1068 = smul.u32 32, %s15
        %p1069 = scmp.lt.s32.totalorder %s1068, 63
        %s1070 = scalar_select %p1069, %s1068, 63
        %s1071 = smul.addr %s1070, 8
        %s1072 = scalar_lea.vmem %s3, %s1071
      $region44: #{tpu_custom_call.1} parent=39 // pred_fallthru
        _
    $region40: #{tpu_custom_call.1} parent=5 // pred_fallthru
      _
  $region6: #{tpu_custom_call.1} parent=0 // loop_footer
    %s13 = sadd.s32 1, %s9
  $region7: #{tpu_custom_call.1} parent=0 // loop_footer_branch
    %8 = sbr.rel target = $region3
  $region8: #{tpu_custom_call.1} parent=0 // loop_exit
    _

</llo_original>
